<compile_context>
chip_gen: v7x
topology: tpu7x:2x2x1
jax: 0.10.0
libtpu: 0.0.40
codegen_flags: <defaults>
</compile_context>

<pallas_src>
import jax
import jax.numpy as jnp
from jax.experimental import pallas as pl
from jax.experimental.pallas import tpu as pltpu

K_IN = 784          # logical input features (28*28)
K_PAD = 896         # 7 * 128 — lane-aligned K
HID = 256           # fc1 output features
N_OUT = 10          # logical output classes
OUT_PAD = 128       # lane-dense padded output width


def _round_up(x, m):
    return ((x + m - 1) // m) * m


def _mlp_kernel(x_ref, w1_ref, b1_ref, w2_ref, b2_ref, o_ref):
    # fc1: bf16 operands, f32 accumulation on the MXU; bias + ReLU in f32 (VPU).
    h = jnp.dot(x_ref[...], w1_ref[...], preferred_element_type=jnp.float32)
    h = jnp.maximum(h + b1_ref[...], 0.0)
    # fc2: lane-dense 128-wide (zero-padded) output; cols 10..127 stay zero.
    y = jnp.dot(h.astype(w2_ref.dtype), w2_ref[...],
                preferred_element_type=jnp.float32)
    o_ref[...] = (y + b2_ref[...]).astype(o_ref.dtype)


def _forward_impl(x2d, w1, b1, w2, b2, tb, n_pad):
    n = x2d.shape[0]

    # Zero-pad + cast operands. Zero padding keeps numerics exact after the
    # final slice: padded K columns contribute 0 to fc1, padded output columns
    # are discarded, padded batch rows are discarded.
    xp = jnp.pad(x2d.astype(jnp.bfloat16),
                 ((0, n_pad - n), (0, K_PAD - K_IN)))
    w1p = jnp.pad(w1.astype(jnp.bfloat16), ((0, K_PAD - K_IN), (0, 0)))
    b1p = b1.reshape(1, HID).astype(jnp.float32)
    w2p = jnp.pad(w2.astype(jnp.bfloat16), ((0, 0), (0, OUT_PAD - N_OUT)))
    b2p = jnp.pad(b2.reshape(1, N_OUT).astype(jnp.float32),
                  ((0, 0), (0, OUT_PAD - N_OUT)))

    grid = (n_pad // tb,)
    flops = 2 * n_pad * (K_PAD * HID + HID * OUT_PAD)
    bytes_accessed = (n_pad * K_PAD * 2                       # x (bf16)
                      + K_PAD * HID * 2 + HID * OUT_PAD * 2   # weights (bf16)
                      + HID * 4 + OUT_PAD * 4                 # biases (f32)
                      + n_pad * OUT_PAD * 4)                  # output (f32)

    out = pl.pallas_call(
        _mlp_kernel,
        out_shape=jax.ShapeDtypeStruct((n_pad, OUT_PAD), jnp.float32),
        grid=grid,
        in_specs=[
            pl.BlockSpec((tb, K_PAD), lambda i: (i, 0)),      # streamed input
            pl.BlockSpec((K_PAD, HID), lambda i: (0, 0)),     # resident w1
            pl.BlockSpec((1, HID), lambda i: (0, 0)),         # resident b1
            pl.BlockSpec((HID, OUT_PAD), lambda i: (0, 0)),   # resident w2
            pl.BlockSpec((1, OUT_PAD), lambda i: (0, 0)),     # resident b2
        ],
        out_specs=pl.BlockSpec((tb, OUT_PAD), lambda i: (i, 0)),
        compiler_params=pltpu.CompilerParams(
            dimension_semantics=("parallel",)),
        cost_estimate=pl.CostEstimate(
            flops=flops, transcendentals=0, bytes_accessed=bytes_accessed),
    )(xp, w1p, b1p, w2p, b2p)

    return out[:n, :N_OUT]


_forward_jit = jax.jit(_forward_impl, static_argnums=(5, 6))


def fast_mnist_forward(x, w1, b1, w2, b2, *, block_batch=1024):
    """Forward pass of FastMNIST.

    x : (N, 1, 28, 28) or (N, 784) float32
    w1: (784, 256)  b1: (1, 256) or (256,)     (nn.Linear weight, transposed)
    w2: (256, 10)   b2: (1, 10)  or (10,)
    Returns (N, 10) float32.
    """
    x2d = x.reshape(-1, K_IN)
    n = x2d.shape[0]

    # Batch tile: multiple of 16 (bf16 sublane packing); small batches get a
    # single tile, large ones are capped at block_batch.
    tb = min(block_batch, _round_up(max(n, 1), 16))
    n_pad = _round_up(n, tb)

    return _forward_jit(x2d, w1, b1, w2, b2, tb, n_pad)


def init_params(key):
    """Deterministic init matching nn.Linear shapes (stored as (in, out))."""
    k1, k2, k3, k4 = jax.random.split(key, 4)
    bound1 = 1.0 / jnp.sqrt(784.0)
    bound2 = 1.0 / jnp.sqrt(256.0)
    w1 = jax.random.uniform(k1, (784, 256), jnp.float32, -bound1, bound1)
    b1 = jax.random.uniform(k2, (1, 256), jnp.float32, -bound1, bound1)
    w2 = jax.random.uniform(k3, (256, 10), jnp.float32, -bound2, bound2)
    b2 = jax.random.uniform(k4, (1, 10), jnp.float32, -bound2, bound2)
    return w1, b1, w2, b2


if __name__ == "__main__":
    key = jax.random.PRNGKey(0)
    kx, kp = jax.random.split(key)

    # Small batch; 1x28x28 (=784) is fixed by the module definition.
    x = jax.random.normal(kx, (2, 1, 28, 28), jnp.float32)
    w1, b1, w2, b2 = init_params(kp)

    out = fast_mnist_forward(x, w1, b1, w2, b2)
    jax.block_until_ready(out)

    # Reference in plain JAX using the same bf16 operand rounding the kernel
    # uses (f32 accumulation), so the comparison is tight.
    x2d = x.reshape(-1, 784)
    xb = x2d.astype(jnp.bfloat16).astype(jnp.float32)
    w1b = w1.astype(jnp.bfloat16).astype(jnp.float32)
    w2b = w2.astype(jnp.bfloat16).astype(jnp.float32)
    h = jnp.maximum(xb @ w1b + b1, 0.0)
    ref = h.astype(jnp.bfloat16).astype(jnp.float32) @ w2b + b2

    assert out.shape == (2, 10)
    assert jnp.allclose(out, ref, atol=2e-2, rtol=2e-2)

    print("KERNEL_OK")
</pallas_src>

<mosaic_0001>
module attributes {stable_mosaic.version = 11 : i64} {
  func.func @_mlp_kernel(%arg0: i32, %arg1: memref<16x896xbf16, #tpu.memory_space<vmem>>, %arg2: memref<896x256xbf16, #tpu.memory_space<vmem>>, %arg3: memref<1x256xf32, #tpu.memory_space<vmem>>, %arg4: memref<256x128xbf16, #tpu.memory_space<vmem>>, %arg5: memref<1x128xf32, #tpu.memory_space<vmem>>, %arg6: memref<16x128xf32, #tpu.memory_space<vmem>>) attributes {dimension_semantics = [#tpu.dimension_semantics<parallel>], iteration_bounds = array<i64: 1>, scalar_prefetch = 0 : i64, scratch_operands = 0 : i64, tpu.core_type = #tpu.core_type<tc>, window_params = [{transform_indices = @transform_0, window_bounds = array<i64: 16, 896>}, {pipeline_mode = #tpu.pipeline_mode<synchronous>, transform_indices = @transform_1, window_bounds = array<i64: 896, 256>}, {pipeline_mode = #tpu.pipeline_mode<synchronous>, transform_indices = @transform_2, window_bounds = array<i64: 1, 256>}, {pipeline_mode = #tpu.pipeline_mode<synchronous>, transform_indices = @transform_3, window_bounds = array<i64: 256, 128>}, {pipeline_mode = #tpu.pipeline_mode<synchronous>, transform_indices = @transform_4, window_bounds = array<i64: 1, 128>}, {transform_indices = @transform_5, window_bounds = array<i64: 16, 128>}]} {
    %c0 = arith.constant 0 : index
    %c0_0 = arith.constant 0 : index
    %0 = vector.load %arg1[%c0, %c0_0] : memref<16x896xbf16, #tpu.memory_space<vmem>>, vector<16x896xbf16>
    %c0_1 = arith.constant 0 : index
    %c0_2 = arith.constant 0 : index
    %1 = vector.load %arg2[%c0_1, %c0_2] : memref<896x256xbf16, #tpu.memory_space<vmem>>, vector<896x256xbf16>
    %cst = arith.constant dense<0.000000e+00> : vector<16x256xf32>
    %2 = tpu.matmul %0, %1, %cst {dimension_numbers = #tpu.dot_dimension_numbers<[1], [0], [0], [1], [0, 0, 1, 1], [], []>} : vector<16x896xbf16>, vector<896x256xbf16>, vector<16x256xf32> -> vector<16x256xf32>
    %c0_3 = arith.constant 0 : index
    %c0_4 = arith.constant 0 : index
    %3 = vector.load %arg3[%c0_3, %c0_4] : memref<1x256xf32, #tpu.memory_space<vmem>>, vector<1x256xf32>
    %4 = vector.broadcast %3 : vector<1x256xf32> to vector<16x256xf32>
    %5 = arith.addf %2, %4 : vector<16x256xf32>
    %cst_5 = arith.constant 0.000000e+00 : f32
    %6 = vector.broadcast %cst_5 : f32 to vector<16x256xf32>
    %7 = arith.maximumf %5, %6 : vector<16x256xf32>
    %8 = arith.truncf %7 : vector<16x256xf32> to vector<16x256xbf16>
    %c0_6 = arith.constant 0 : index
    %c0_7 = arith.constant 0 : index
    %9 = vector.load %arg4[%c0_6, %c0_7] : memref<256x128xbf16, #tpu.memory_space<vmem>>, vector<256x128xbf16>
    %cst_8 = arith.constant dense<0.000000e+00> : vector<16x128xf32>
    %10 = tpu.matmul %8, %9, %cst_8 {dimension_numbers = #tpu.dot_dimension_numbers<[1], [0], [0], [1], [0, 0, 1, 1], [], []>} : vector<16x256xbf16>, vector<256x128xbf16>, vector<16x128xf32> -> vector<16x128xf32>
    %c0_9 = arith.constant 0 : index
    %c0_10 = arith.constant 0 : index
    %11 = vector.load %arg5[%c0_9, %c0_10] : memref<1x128xf32, #tpu.memory_space<vmem>>, vector<1x128xf32>
    %12 = vector.broadcast %11 : vector<1x128xf32> to vector<16x128xf32>
    %13 = arith.addf %10, %12 : vector<16x128xf32>
    %c0_11 = arith.constant 0 : index
    %c0_12 = arith.constant 0 : index
    %14 = vector.load %arg6[%c0_11, %c0_12] : memref<16x128xf32, #tpu.memory_space<vmem>>, vector<16x128xf32>
    tpu.vector_store %arg6[%c0_11, %c0_12], %13 {strides = array<i32>} : memref<16x128xf32, #tpu.memory_space<vmem>>, vector<16x128xf32>,
    return
  }
  func.func @transform_0(%arg0: i32) -> (i32, i32) {
    %c0_i32 = arith.constant 0 : i32
    %c0_i32_0 = arith.constant 0 : i32
    return %arg0, %c0_i32 : i32, i32
  }
  func.func @transform_1(%arg0: i32) -> (i32, i32) {
    %c0_i32 = arith.constant 0 : i32
    %c0_i32_0 = arith.constant 0 : i32
    %c0_i32_1 = arith.constant 0 : i32
    return %c0_i32, %c0_i32_0 : i32, i32
  }
  func.func @transform_2(%arg0: i32) -> (i32, i32) {
    %c0_i32 = arith.constant 0 : i32
    %c0_i32_0 = arith.constant 0 : i32
    %c0_i32_1 = arith.constant 0 : i32
    return %c0_i32, %c0_i32_0 : i32, i32
  }
  func.func @transform_3(%arg0: i32) -> (i32, i32) {
    %c0_i32 = arith.constant 0 : i32
    %c0_i32_0 = arith.constant 0 : i32
    %c0_i32_1 = arith.constant 0 : i32
    return %c0_i32, %c0_i32_0 : i32, i32
  }
  func.func @transform_4(%arg0: i32) -> (i32, i32) {
    %c0_i32 = arith.constant 0 : i32
    %c0_i32_0 = arith.constant 0 : i32
    %c0_i32_1 = arith.constant 0 : i32
    return %c0_i32, %c0_i32_0 : i32, i32
  }
  func.func @transform_5(%arg0: i32) -> (i32, i32) {
    %c0_i32 = arith.constant 0 : i32
    %c0_i32_0 = arith.constant 0 : i32
    return %arg0, %c0_i32 : i32, i32
  }
}

</mosaic_0001>

<llo_original>
// kernel: _forward_impl.1
$region0: #{_forward_impl.1}
  #allocation0 [shape = 'u32[]', space=smem, size = 0x4, offset = 0x4, fixed_abs, tag = 'smem constant byte address 0x4 - core index']
  #allocation1 [shape = 'u32[144,128]{1,0:T(1,128)}', space=vmem, size = 0x12000, scoped, tag = 'internal scratch']
  %s0 = inlined_call_operand.vmem [shape: bf16[16,896], index: 0, kind: input, shape index: {}]
  %s1 = inlined_call_operand.vmem [shape: bf16[896,256], index: 1, kind: input, shape index: {}]
  %s2 = inlined_call_operand.vmem [shape: f32[1,256], index: 2, kind: input, shape index: {}]
  %s3 = inlined_call_operand.vmem [shape: bf16[256,128], index: 3, kind: input, shape index: {}]
  %s4 = inlined_call_operand.vmem [shape: f32[1,128], index: 4, kind: input, shape index: {}]
  %s5 = inlined_call_operand.vmem [shape: f32[16,128], index: 5, kind: output, shape index: {}]
  %s6 = sld [smem:[#allocation0]]
  $region30: #{_forward_impl.1} parent=0
    _
  %s8 = ssub.s32 1, %s6
  %s9 = scalar_select 0, %s8, %s6
  // Predicated region
  $region2: #{_forward_impl.1} parent=0 // pred_check
    _
  $region3: #{_forward_impl.1} parent=0 // pred_check_branch
    %11 = sbr.rel (0) target = $region5
  $region4: #{_forward_impl.1} parent=0 // pred_region
    _
  $region5: #{_forward_impl.1} parent=0 // pred_fallthru
    _
  // Predicated region
  $region6: #{_forward_impl.1} parent=0 // pred_check
    _
  $region7: #{_forward_impl.1} parent=0 // pred_check_branch
    %13 = sbr.rel (0) target = $region9
  $region8: #{_forward_impl.1} parent=0 // pred_region
    _
  $region9: #{_forward_impl.1} parent=0 // pred_fallthru
    _
  // Predicated region
  $region10: #{_forward_impl.1} parent=0 // pred_check
    _
  $region11: #{_forward_impl.1} parent=0 // pred_check_branch
    %15 = sbr.rel (0) target = $region13
  $region12: #{_forward_impl.1} parent=0 // pred_region
    _
  $region13: #{_forward_impl.1} parent=0 // pred_fallthru
    _
  // Predicated region
  $region14: #{_forward_impl.1} parent=0 // pred_check
    _
  $region15: #{_forward_impl.1} parent=0 // pred_check_branch
    %17 = sbr.rel (0) target = $region17
  $region16: #{_forward_impl.1} parent=0 // pred_region
    _
  $region17: #{_forward_impl.1} parent=0 // pred_fallthru
    _
  // Predicated region
  $region18: #{_forward_impl.1} parent=0 // pred_check
    _
  $region19: #{_forward_impl.1} parent=0 // pred_check_branch
    %19 = sbr.rel (0) target = $region21
  $region20: #{_forward_impl.1} parent=0 // pred_region
    _
  $region21: #{_forward_impl.1} parent=0 // pred_fallthru
    _
  %v21 = vld [vmem:[%s0] sm:$0xff]
  %v22 = vld [vmem:[%s0 + $0x8] sm:$0xff]
  %v23 = vld [vmem:[%s0 + $0x10] sm:$0xff]
  %v24 = vld [vmem:[%s0 + $0x18] sm:$0xf]
  %v25 = vld [vmem:[%s0 + $0x1c] sm:$0xff]
  %v26 = vld [vmem:[%s0 + $0x24] sm:$0xff]
  %v27 = vld [vmem:[%s0 + $0x2c] sm:$0xff]
  %v28 = vld [vmem:[%s0 + $0x34] sm:$0xf]
  %v29 = vld [vmem:[%s1] sm:$0xff]
  %v30 = vld [vmem:[%s1 + $0x8] sm:$0xff]
  %v31 = vld [vmem:[%s1 + $0x10] sm:$0xff]
  %v32 = vld [vmem:[%s1 + $0x18] sm:$0xff]
  %v33 = vld [vmem:[%s1 + $0x20] sm:$0xff]
  %v34 = vld [vmem:[%s1 + $0x28] sm:$0xff]
  %v35 = vld [vmem:[%s1 + $0x30] sm:$0xff]
  %v36 = vld [vmem:[%s1 + $0x38] sm:$0xff]
  %v37 = vld [vmem:[%s1 + $0x40] sm:$0xff]
  %v38 = vld [vmem:[%s1 + $0x48] sm:$0xff]
  %v39 = vld [vmem:[%s1 + $0x50] sm:$0xff]
  %v40 = vld [vmem:[%s1 + $0x58] sm:$0xff]
  %v41 = vld [vmem:[%s1 + $0x60] sm:$0xff]
  %v42 = vld [vmem:[%s1 + $0x68] sm:$0xff]
  %v43 = vld [vmem:[%s1 + $0x70] sm:$0xff]
  %v44 = vld [vmem:[%s1 + $0x78] sm:$0xff]
  %v45 = vld [vmem:[%s1 + $0x80] sm:$0xff]
  %v46 = vld [vmem:[%s1 + $0x88] sm:$0xff]
  %v47 = vld [vmem:[%s1 + $0x90] sm:$0xff]
  %v48 = vld [vmem:[%s1 + $0x98] sm:$0xff]
  %v49 = vld [vmem:[%s1 + $0xa0] sm:$0xff]
  %v50 = vld [vmem:[%s1 + $0xa8] sm:$0xff]
  %v51 = vld [vmem:[%s1 + $0xb0] sm:$0xff]
  %v52 = vld [vmem:[%s1 + $0xb8] sm:$0xff]
  %v53 = vld [vmem:[%s1 + $0xc0] sm:$0xff]
  %v54 = vld [vmem:[%s1 + $0xc8] sm:$0xff]
  %v55 = vld [vmem:[%s1 + $0xd0] sm:$0xff]
  %v56 = vld [vmem:[%s1 + $0xd8] sm:$0xff]
  %v57 = vld [vmem:[%s1 + $0xe0] sm:$0xff]
  %v58 = vld [vmem:[%s1 + $0xe8] sm:$0xff]
  %v59 = vld [vmem:[%s1 + $0xf0] sm:$0xff]
  %v60 = vld [vmem:[%s1 + $0xf8] sm:$0xff]
  %v61 = vld [vmem:[%s1 + $0x100] sm:$0xff]
  %v62 = vld [vmem:[%s1 + $0x108] sm:$0xff]
  %v63 = vld [vmem:[%s1 + $0x110] sm:$0xff]
  %v64 = vld [vmem:[%s1 + $0x118] sm:$0xff]
  %v65 = vld [vmem:[%s1 + $0x120] sm:$0xff]
  %v66 = vld [vmem:[%s1 + $0x128] sm:$0xff]
  %v67 = vld [vmem:[%s1 + $0x130] sm:$0xff]
  %v68 = vld [vmem:[%s1 + $0x138] sm:$0xff]
  %v69 = vld [vmem:[%s1 + $0x140] sm:$0xff]
  %v70 = vld [vmem:[%s1 + $0x148] sm:$0xff]
  %v71 = vld [vmem:[%s1 + $0x150] sm:$0xff]
  %v72 = vld [vmem:[%s1 + $0x158] sm:$0xff]
  %v73 = vld [vmem:[%s1 + $0x160] sm:$0xff]
  %v74 = vld [vmem:[%s1 + $0x168] sm:$0xff]
  %v75 = vld [vmem:[%s1 + $0x170] sm:$0xff]
  %v76 = vld [vmem:[%s1 + $0x178] sm:$0xff]
  %v77 = vld [vmem:[%s1 + $0x180] sm:$0xff]
  %v78 = vld [vmem:[%s1 + $0x188] sm:$0xff]
  %v79 = vld [vmem:[%s1 + $0x190] sm:$0xff]
  %v80 = vld [vmem:[%s1 + $0x198] sm:$0xff]
  %v81 = vld [vmem:[%s1 + $0x1a0] sm:$0xff]
  %v82 = vld [vmem:[%s1 + $0x1a8] sm:$0xff]
  %v83 = vld [vmem:[%s1 + $0x1b0] sm:$0xff]
  %v84 = vld [vmem:[%s1 + $0x1b8] sm:$0xff]
  %v85 = vld [vmem:[%s1 + $0x1c0] sm:$0xff]
  %v86 = vld [vmem:[%s1 + $0x1c8] sm:$0xff]
  %v87 = vld [vmem:[%s1 + $0x1d0] sm:$0xff]
  %v88 = vld [vmem:[%s1 + $0x1d8] sm:$0xff]
  %v89 = vld [vmem:[%s1 + $0x1e0] sm:$0xff]
  %v90 = vld [vmem:[%s1 + $0x1e8] sm:$0xff]
  %v91 = vld [vmem:[%s1 + $0x1f0] sm:$0xff]
  %v92 = vld [vmem:[%s1 + $0x1f8] sm:$0xff]
  %v93 = vld [vmem:[%s1 + $0x200] sm:$0xff]
  %v94 = vld [vmem:[%s1 + $0x208] sm:$0xff]
  %v95 = vld [vmem:[%s1 + $0x210] sm:$0xff]
  %v96 = vld [vmem:[%s1 + $0x218] sm:$0xff]
  %v97 = vld [vmem:[%s1 + $0x220] sm:$0xff]
  %v98 = vld [vmem:[%s1 + $0x228] sm:$0xff]
  %v99 = vld [vmem:[%s1 + $0x230] sm:$0xff]
  %v100 = vld [vmem:[%s1 + $0x238] sm:$0xff]
  %v101 = vld [vmem:[%s1 + $0x240] sm:$0xff]
  %v102 = vld [vmem:[%s1 + $0x248] sm:$0xff]
  %v103 = vld [vmem:[%s1 + $0x250] sm:$0xff]
  %v104 = vld [vmem:[%s1 + $0x258] sm:$0xff]
  %v105 = vld [vmem:[%s1 + $0x260] sm:$0xff]
  %v106 = vld [vmem:[%s1 + $0x268] sm:$0xff]
  %v107 = vld [vmem:[%s1 + $0x270] sm:$0xff]
  %v108 = vld [vmem:[%s1 + $0x278] sm:$0xff]
  %v109 = vld [vmem:[%s1 + $0x280] sm:$0xff]
  %v110 = vld [vmem:[%s1 + $0x288] sm:$0xff]
  %v111 = vld [vmem:[%s1 + $0x290] sm:$0xff]
  %v112 = vld [vmem:[%s1 + $0x298] sm:$0xff]
  %v113 = vld [vmem:[%s1 + $0x2a0] sm:$0xff]
  %v114 = vld [vmem:[%s1 + $0x2a8] sm:$0xff]
  %v115 = vld [vmem:[%s1 + $0x2b0] sm:$0xff]
  %v116 = vld [vmem:[%s1 + $0x2b8] sm:$0xff]
  %v117 = vld [vmem:[%s1 + $0x2c0] sm:$0xff]
  %v118 = vld [vmem:[%s1 + $0x2c8] sm:$0xff]
  %v119 = vld [vmem:[%s1 + $0x2d0] sm:$0xff]
  %v120 = vld [vmem:[%s1 + $0x2d8] sm:$0xff]
  %v121 = vld [vmem:[%s1 + $0x2e0] sm:$0xff]
  %v122 = vld [vmem:[%s1 + $0x2e8] sm:$0xff]
  %v123 = vld [vmem:[%s1 + $0x2f0] sm:$0xff]
  %v124 = vld [vmem:[%s1 + $0x2f8] sm:$0xff]
  %v125 = vld [vmem:[%s1 + $0x300] sm:$0xff]
  %v126 = vld [vmem:[%s1 + $0x308] sm:$0xff]
  %v127 = vld [vmem:[%s1 + $0x310] sm:$0xff]
  %v128 = vld [vmem:[%s1 + $0x318] sm:$0xff]
  %v129 = vld [vmem:[%s1 + $0x320] sm:$0xff]
  %v130 = vld [vmem:[%s1 + $0x328] sm:$0xff]
  %v131 = vld [vmem:[%s1 + $0x330] sm:$0xff]
  %v132 = vld [vmem:[%s1 + $0x338] sm:$0xff]
  %v133 = vld [vmem:[%s1 + $0x340] sm:$0xff]
  %v134 = vld [vmem:[%s1 + $0x348] sm:$0xff]
  %v135 = vld [vmem:[%s1 + $0x350] sm:$0xff]
  %v136 = vld [vmem:[%s1 + $0x358] sm:$0xff]
  %v137 = vld [vmem:[%s1 + $0x360] sm:$0xff]
  %v138 = vld [vmem:[%s1 + $0x368] sm:$0xff]
  %v139 = vld [vmem:[%s1 + $0x370] sm:$0xff]
  %v140 = vld [vmem:[%s1 + $0x378] sm:$0xff]
  %v141 = vld [vmem:[%s2] sm:$0x3]
  %v143 = vlaneseq
  %v144 = vshrl.u32 %v143, 7
  %v145 = vsub.s32 0, %v144
  %v146 = vrot.slane %v141, %v145
  %v147 = vlaneseq
  %v148 = vshrl.u32 %v147, 7
  %v149 = vsub.s32 1, %v148
  %v150 = vrot.slane %v141, %v149
  %v161 = vunpack.c.l.b16 %v21
  %v162 = vunpack.c.h.b16 %v21
  %v163 = vunpack.c.l.b16 %v22
  %v164 = vunpack.c.h.b16 %v22
  %v165 = vunpack.c.l.b16 %v23
  %v166 = vunpack.c.h.b16 %v23
  %v167 = vunpack.c.l.b16 %v24
  %v168 = vunpack.c.l.b16 %v25
  %v169 = vunpack.c.h.b16 %v25
  %v170 = vunpack.c.l.b16 %v26
  %v171 = vunpack.c.h.b16 %v26
  %v172 = vunpack.c.l.b16 %v27
  %v173 = vunpack.c.h.b16 %v27
  %v174 = vunpack.c.l.b16 %v28
  %v175 = vpack.c.b16 %v168, %v161
  %v176 = vpack.c.b16 %v169, %v162
  %v177 = vpack.c.b16 %v170, %v163
  %v178 = vpack.c.b16 %v171, %v164
  %v179 = vpack.c.b16 %v172, %v165
  %v180 = vpack.c.b16 %v173, %v166
  %v181 = vpack.c.b16 %v174, %v167
  %v301 = vunpack.c.l.b16 %v29
  %v302 = vunpack.c.h.b16 %v29
  %v303 = vunpack.c.l.b16 %v30
  %v304 = vunpack.c.h.b16 %v30
  %v305 = vunpack.c.l.b16 %v31
  %v306 = vunpack.c.h.b16 %v31
  %v307 = vunpack.c.l.b16 %v32
  %v308 = vunpack.c.h.b16 %v32
  %v309 = vunpack.c.l.b16 %v33
  %v310 = vunpack.c.h.b16 %v33
  %v311 = vunpack.c.l.b16 %v34
  %v312 = vunpack.c.h.b16 %v34
  %v313 = vunpack.c.l.b16 %v35
  %v314 = vunpack.c.h.b16 %v35
  %v315 = vunpack.c.l.b16 %v36
  %v316 = vunpack.c.h.b16 %v36
  %v317 = vunpack.c.l.b16 %v37
  %v318 = vunpack.c.h.b16 %v37
  %v319 = vunpack.c.l.b16 %v38
  %v320 = vunpack.c.h.b16 %v38
  %v321 = vunpack.c.l.b16 %v39
  %v322 = vunpack.c.h.b16 %v39
  %v323 = vunpack.c.l.b16 %v40
  %v324 = vunpack.c.h.b16 %v40
  %v325 = vunpack.c.l.b16 %v41
  %v326 = vunpack.c.h.b16 %v41
  %v327 = vunpack.c.l.b16 %v42
  %v328 = vunpack.c.h.b16 %v42
  %v329 = vunpack.c.l.b16 %v43
  %v330 = vunpack.c.h.b16 %v43
  %v331 = vunpack.c.l.b16 %v44
  %v332 = vunpack.c.h.b16 %v44
  %v333 = vunpack.c.l.b16 %v45
  %v334 = vunpack.c.h.b16 %v45
  %v335 = vunpack.c.l.b16 %v46
  %v336 = vunpack.c.h.b16 %v46
  %v337 = vunpack.c.l.b16 %v47
  %v338 = vunpack.c.h.b16 %v47
  %v339 = vunpack.c.l.b16 %v48
  %v340 = vunpack.c.h.b16 %v48
  %v341 = vunpack.c.l.b16 %v49
  %v342 = vunpack.c.h.b16 %v49
  %v343 = vunpack.c.l.b16 %v50
  %v344 = vunpack.c.h.b16 %v50
  %v345 = vunpack.c.l.b16 %v51
  %v346 = vunpack.c.h.b16 %v51
  %v347 = vunpack.c.l.b16 %v52
  %v348 = vunpack.c.h.b16 %v52
  %v349 = vunpack.c.l.b16 %v53
  %v350 = vunpack.c.h.b16 %v53
  %v351 = vunpack.c.l.b16 %v54
  %v352 = vunpack.c.h.b16 %v54
  %v353 = vunpack.c.l.b16 %v55
  %v354 = vunpack.c.h.b16 %v55
  %v355 = vunpack.c.l.b16 %v56
  %v356 = vunpack.c.h.b16 %v56
  %v357 = vunpack.c.l.b16 %v57
  %v358 = vunpack.c.h.b16 %v57
  %v359 = vunpack.c.l.b16 %v58
  %v360 = vunpack.c.h.b16 %v58
  %v361 = vunpack.c.l.b16 %v59
  %v362 = vunpack.c.h.b16 %v59
  %v363 = vunpack.c.l.b16 %v60
  %v364 = vunpack.c.h.b16 %v60
  %v365 = vunpack.c.l.b16 %v61
  %v366 = vunpack.c.h.b16 %v61
  %v367 = vunpack.c.l.b16 %v62
  %v368 = vunpack.c.h.b16 %v62
  %v369 = vunpack.c.l.b16 %v63
  %v370 = vunpack.c.h.b16 %v63
  %v371 = vunpack.c.l.b16 %v64
  %v372 = vunpack.c.h.b16 %v64
  %v373 = vunpack.c.l.b16 %v65
  %v374 = vunpack.c.h.b16 %v65
  %v375 = vunpack.c.l.b16 %v66
  %v376 = vunpack.c.h.b16 %v66
  %v377 = vunpack.c.l.b16 %v67
  %v378 = vunpack.c.h.b16 %v67
  %v379 = vunpack.c.l.b16 %v68
  %v380 = vunpack.c.h.b16 %v68
  %v381 = vunpack.c.l.b16 %v69
  %v382 = vunpack.c.h.b16 %v69
  %v383 = vunpack.c.l.b16 %v70
  %v384 = vunpack.c.h.b16 %v70
  %v385 = vunpack.c.l.b16 %v71
  %v386 = vunpack.c.h.b16 %v71
  %v387 = vunpack.c.l.b16 %v72
  %v388 = vunpack.c.h.b16 %v72
  %v389 = vunpack.c.l.b16 %v73
  %v390 = vunpack.c.h.b16 %v73
  %v391 = vunpack.c.l.b16 %v74
  %v392 = vunpack.c.h.b16 %v74
  %v393 = vunpack.c.l.b16 %v75
  %v394 = vunpack.c.h.b16 %v75
  %v395 = vunpack.c.l.b16 %v76
  %v396 = vunpack.c.h.b16 %v76
  %v397 = vunpack.c.l.b16 %v77
  %v398 = vunpack.c.h.b16 %v77
  %v399 = vunpack.c.l.b16 %v78
  %v400 = vunpack.c.h.b16 %v78
  %v401 = vunpack.c.l.b16 %v79
  %v402 = vunpack.c.h.b16 %v79
  %v403 = vunpack.c.l.b16 %v80
  %v404 = vunpack.c.h.b16 %v80
  %v405 = vunpack.c.l.b16 %v81
  %v406 = vunpack.c.h.b16 %v81
  %v407 = vunpack.c.l.b16 %v82
  %v408 = vunpack.c.h.b16 %v82
  %v409 = vunpack.c.l.b16 %v83
  %v410 = vunpack.c.h.b16 %v83
  %v411 = vunpack.c.l.b16 %v84
  %v412 = vunpack.c.h.b16 %v84
  %v413 = vunpack.c.l.b16 %v85
  %v414 = vunpack.c.h.b16 %v85
  %v415 = vunpack.c.l.b16 %v86
  %v416 = vunpack.c.h.b16 %v86
  %v417 = vunpack.c.l.b16 %v87
  %v418 = vunpack.c.h.b16 %v87
  %v419 = vunpack.c.l.b16 %v88
  %v420 = vunpack.c.h.b16 %v88
  %v421 = vunpack.c.l.b16 %v89
  %v422 = vunpack.c.h.b16 %v89
  %v423 = vunpack.c.l.b16 %v90
  %v424 = vunpack.c.h.b16 %v90
  %v425 = vunpack.c.l.b16 %v91
  %v426 = vunpack.c.h.b16 %v91
  %v427 = vunpack.c.l.b16 %v92
  %v428 = vunpack.c.h.b16 %v92
  %v429 = vunpack.c.l.b16 %v93
  %v430 = vunpack.c.h.b16 %v93
  %v431 = vunpack.c.l.b16 %v94
  %v432 = vunpack.c.h.b16 %v94
  %v433 = vunpack.c.l.b16 %v95
  %v434 = vunpack.c.h.b16 %v95
  %v435 = vunpack.c.l.b16 %v96
  %v436 = vunpack.c.h.b16 %v96
  %v437 = vunpack.c.l.b16 %v97
  %v438 = vunpack.c.h.b16 %v97
  %v439 = vunpack.c.l.b16 %v98
  %v440 = vunpack.c.h.b16 %v98
  %v441 = vunpack.c.l.b16 %v99
  %v442 = vunpack.c.h.b16 %v99
  %v443 = vunpack.c.l.b16 %v100
  %v444 = vunpack.c.h.b16 %v100
  %v445 = vunpack.c.l.b16 %v101
  %v446 = vunpack.c.h.b16 %v101
  %v447 = vunpack.c.l.b16 %v102
  %v448 = vunpack.c.h.b16 %v102
  %v449 = vunpack.c.l.b16 %v103
  %v450 = vunpack.c.h.b16 %v103
  %v451 = vunpack.c.l.b16 %v104
  %v452 = vunpack.c.h.b16 %v104
  %v453 = vunpack.c.l.b16 %v105
  %v454 = vunpack.c.h.b16 %v105
  %v455 = vunpack.c.l.b16 %v106
  %v456 = vunpack.c.h.b16 %v106
  %v457 = vunpack.c.l.b16 %v107
  %v458 = vunpack.c.h.b16 %v107
  %v459 = vunpack.c.l.b16 %v108
  %v460 = vunpack.c.h.b16 %v108
  %v461 = vunpack.c.l.b16 %v109
  %v462 = vunpack.c.h.b16 %v109
  %v463 = vunpack.c.l.b16 %v110
  %v464 = vunpack.c.h.b16 %v110
  %v465 = vunpack.c.l.b16 %v111
  %v466 = vunpack.c.h.b16 %v111
  %v467 = vunpack.c.l.b16 %v112
  %v468 = vunpack.c.h.b16 %v112
  %v469 = vunpack.c.l.b16 %v113
  %v470 = vunpack.c.h.b16 %v113
  %v471 = vunpack.c.l.b16 %v114
  %v472 = vunpack.c.h.b16 %v114
  %v473 = vunpack.c.l.b16 %v115
  %v474 = vunpack.c.h.b16 %v115
  %v475 = vunpack.c.l.b16 %v116
  %v476 = vunpack.c.h.b16 %v116
  %v477 = vunpack.c.l.b16 %v117
  %v478 = vunpack.c.h.b16 %v117
  %v479 = vunpack.c.l.b16 %v118
  %v480 = vunpack.c.h.b16 %v118
  %v481 = vunpack.c.l.b16 %v119
  %v482 = vunpack.c.h.b16 %v119
  %v483 = vunpack.c.l.b16 %v120
  %v484 = vunpack.c.h.b16 %v120
  %v485 = vunpack.c.l.b16 %v121
  %v486 = vunpack.c.h.b16 %v121
  %v487 = vunpack.c.l.b16 %v122
  %v488 = vunpack.c.h.b16 %v122
  %v489 = vunpack.c.l.b16 %v123
  %v490 = vunpack.c.h.b16 %v123
  %v491 = vunpack.c.l.b16 %v124
  %v492 = vunpack.c.h.b16 %v124
  %v493 = vunpack.c.l.b16 %v125
  %v494 = vunpack.c.h.b16 %v125
  %v495 = vunpack.c.l.b16 %v126
  %v496 = vunpack.c.h.b16 %v126
  %v497 = vunpack.c.l.b16 %v127
  %v498 = vunpack.c.h.b16 %v127
  %v499 = vunpack.c.l.b16 %v128
  %v500 = vunpack.c.h.b16 %v128
  %v501 = vunpack.c.l.b16 %v129
  %v502 = vunpack.c.h.b16 %v129
  %v503 = vunpack.c.l.b16 %v130
  %v504 = vunpack.c.h.b16 %v130
  %v505 = vunpack.c.l.b16 %v131
  %v506 = vunpack.c.h.b16 %v131
  %v507 = vunpack.c.l.b16 %v132
  %v508 = vunpack.c.h.b16 %v132
  %v509 = vunpack.c.l.b16 %v133
  %v510 = vunpack.c.h.b16 %v133
  %v511 = vunpack.c.l.b16 %v134
  %v512 = vunpack.c.h.b16 %v134
  %v513 = vunpack.c.l.b16 %v135
  %v514 = vunpack.c.h.b16 %v135
  %v515 = vunpack.c.l.b16 %v136
  %v516 = vunpack.c.h.b16 %v136
  %v517 = vunpack.c.l.b16 %v137
  %v518 = vunpack.c.h.b16 %v137
  %v519 = vunpack.c.l.b16 %v138
  %v520 = vunpack.c.h.b16 %v138
  %v521 = vunpack.c.l.b16 %v139
  %v522 = vunpack.c.h.b16 %v139
  %v523 = vunpack.c.l.b16 %v140
  %v524 = vunpack.c.h.b16 %v140
  %v525 = vpack.c.b16 %v303, %v301
  %v526 = vpack.c.b16 %v304, %v302
  %v527 = vpack.c.b16 %v307, %v305
  %v528 = vpack.c.b16 %v308, %v306
  %v529 = vpack.c.b16 %v311, %v309
  %v530 = vpack.c.b16 %v312, %v310
  %v531 = vpack.c.b16 %v315, %v313
  %v532 = vpack.c.b16 %v316, %v314
  %v533 = vpack.c.b16 %v319, %v317
  %v534 = vpack.c.b16 %v320, %v318
  %v535 = vpack.c.b16 %v323, %v321
  %v536 = vpack.c.b16 %v324, %v322
  %v537 = vpack.c.b16 %v327, %v325
  %v538 = vpack.c.b16 %v328, %v326
  %v539 = vpack.c.b16 %v331, %v329
  %v540 = vpack.c.b16 %v332, %v330
  %v541 = vpack.c.b16 %v335, %v333
  %v542 = vpack.c.b16 %v336, %v334
  %v543 = vpack.c.b16 %v339, %v337
  %v544 = vpack.c.b16 %v340, %v338
  %v545 = vpack.c.b16 %v343, %v341
  %v546 = vpack.c.b16 %v344, %v342
  %v547 = vpack.c.b16 %v347, %v345
  %v548 = vpack.c.b16 %v348, %v346
  %v549 = vpack.c.b16 %v351, %v349
  %v550 = vpack.c.b16 %v352, %v350
  %v551 = vpack.c.b16 %v355, %v353
  %v552 = vpack.c.b16 %v356, %v354
  %v553 = vpack.c.b16 %v359, %v357
  %v554 = vpack.c.b16 %v360, %v358
  %v555 = vpack.c.b16 %v363, %v361
  %v556 = vpack.c.b16 %v364, %v362
  %v557 = vpack.c.b16 %v367, %v365
  %v558 = vpack.c.b16 %v368, %v366
  %v559 = vpack.c.b16 %v371, %v369
  %v560 = vpack.c.b16 %v372, %v370
  %v561 = vpack.c.b16 %v375, %v373
  %v562 = vpack.c.b16 %v376, %v374
  %v563 = vpack.c.b16 %v379, %v377
  %v564 = vpack.c.b16 %v380, %v378
  %v565 = vpack.c.b16 %v383, %v381
  %v566 = vpack.c.b16 %v384, %v382
  %v567 = vpack.c.b16 %v387, %v385
  %v568 = vpack.c.b16 %v388, %v386
  %v569 = vpack.c.b16 %v391, %v389
  %v570 = vpack.c.b16 %v392, %v390
  %v571 = vpack.c.b16 %v395, %v393
  %v572 = vpack.c.b16 %v396, %v394
  %v573 = vpack.c.b16 %v399, %v397
  %v574 = vpack.c.b16 %v400, %v398
  %v575 = vpack.c.b16 %v403, %v401
  %v576 = vpack.c.b16 %v404, %v402
  %v577 = vpack.c.b16 %v407, %v405
  %v578 = vpack.c.b16 %v408, %v406
  %v579 = vpack.c.b16 %v411, %v409
  %v580 = vpack.c.b16 %v412, %v410
  %v581 = vpack.c.b16 %v415, %v413
  %v582 = vpack.c.b16 %v416, %v414
  %v583 = vpack.c.b16 %v419, %v417
  %v584 = vpack.c.b16 %v420, %v418
  %v585 = vpack.c.b16 %v423, %v421
  %v586 = vpack.c.b16 %v424, %v422
  %v587 = vpack.c.b16 %v427, %v425
  %v588 = vpack.c.b16 %v428, %v426
  %v589 = vpack.c.b16 %v431, %v429
  %v590 = vpack.c.b16 %v432, %v430
  %v591 = vpack.c.b16 %v435, %v433
  %v592 = vpack.c.b16 %v436, %v434
  %v593 = vpack.c.b16 %v439, %v437
  %v594 = vpack.c.b16 %v440, %v438
  %v595 = vpack.c.b16 %v443, %v441
  %v596 = vpack.c.b16 %v444, %v442
  %v597 = vpack.c.b16 %v447, %v445
  %v598 = vpack.c.b16 %v448, %v446
  %v599 = vpack.c.b16 %v451, %v449
  %v600 = vpack.c.b16 %v452, %v450
  %v601 = vpack.c.b16 %v455, %v453
  %v602 = vpack.c.b16 %v456, %v454
  %v603 = vpack.c.b16 %v459, %v457
  %v604 = vpack.c.b16 %v460, %v458
  %v605 = vpack.c.b16 %v463, %v461
  %v606 = vpack.c.b16 %v464, %v462
  %v607 = vpack.c.b16 %v467, %v465
  %v608 = vpack.c.b16 %v468, %v466
  %v609 = vpack.c.b16 %v471, %v469
  %v610 = vpack.c.b16 %v472, %v470
  %v611 = vpack.c.b16 %v475, %v473
  %v612 = vpack.c.b16 %v476, %v474
  %v613 = vpack.c.b16 %v479, %v477
  %v614 = vpack.c.b16 %v480, %v478
  %v615 = vpack.c.b16 %v483, %v481
  %v616 = vpack.c.b16 %v484, %v482
  %v617 = vpack.c.b16 %v487, %v485
  %v618 = vpack.c.b16 %v488, %v486
  %v619 = vpack.c.b16 %v491, %v489
  %v620 = vpack.c.b16 %v492, %v490
  %v621 = vpack.c.b16 %v495, %v493
  %v622 = vpack.c.b16 %v496, %v494
  %v623 = vpack.c.b16 %v499, %v497
  %v624 = vpack.c.b16 %v500, %v498
  %v625 = vpack.c.b16 %v503, %v501
  %v626 = vpack.c.b16 %v504, %v502
  %v627 = vpack.c.b16 %v507, %v505
  %v628 = vpack.c.b16 %v508, %v506
  %v629 = vpack.c.b16 %v511, %v509
  %v630 = vpack.c.b16 %v512, %v510
  %v631 = vpack.c.b16 %v515, %v513
  %v632 = vpack.c.b16 %v516, %v514
  %v633 = vpack.c.b16 %v519, %v517
  %v634 = vpack.c.b16 %v520, %v518
  %v635 = vpack.c.b16 %v523, %v521
  %v636 = vpack.c.b16 %v524, %v522
  %749 = vmatprep.subr.bf16.mxu0 %v526
  %750 = vmatpush1.bf16.msra.mxu0 %v525
  %751 = vmatprep.subr.bf16.mxu0 %v528
  %752 = vmatpush1.bf16.msra.mxu0 %v527
  %753 = vmatprep.subr.bf16.mxu0 %v530
  %754 = vmatpush1.bf16.msra.mxu0 %v529
  %755 = vmatprep.subr.bf16.mxu0 %v532
  %756 = vmatpush1.bf16.msra.mxu0 %v531
  %757 = vmatprep.subr.bf16.mxu0 %v534
  %758 = vmatpush1.bf16.msra.mxu0 %v533
  %759 = vmatprep.subr.bf16.mxu0 %v536
  %760 = vmatpush1.bf16.msra.mxu0 %v535
  %761 = vmatprep.subr.bf16.mxu0 %v538
  %762 = vmatpush1.bf16.msra.mxu0 %v537
  %763 = vmatprep.subr.bf16.mxu0 %v540
  %764 = vmatpush1.bf16.msra.mxu0 %v539
  %765 = vmatprep.subr.bf16.mxu0 %v542
  %766 = vmatpush1.bf16.msra.mxu0 %v541
  %767 = vmatprep.subr.bf16.mxu0 %v544
  %768 = vmatpush1.bf16.msra.mxu0 %v543
  %769 = vmatprep.subr.bf16.mxu0 %v546
  %770 = vmatpush1.bf16.msra.mxu0 %v545
  %771 = vmatprep.subr.bf16.mxu0 %v548
  %772 = vmatpush1.bf16.msra.mxu0 %v547
  %773 = vmatprep.subr.bf16.mxu0 %v550
  %774 = vmatpush1.bf16.msra.mxu0 %v549
  %775 = vmatprep.subr.bf16.mxu0 %v552
  %776 = vmatpush1.bf16.msra.mxu0 %v551
  %777 = vmatprep.subr.bf16.mxu0 %v554
  %778 = vmatpush1.bf16.msra.mxu0 %v553
  %779 = vmatprep.subr.bf16.mxu0 %v556
  %780 = vmatpush1.bf16.msra.mxu0 %v555
  %781 = vmatprep.mubr.bf16.mxu0 %v176
  %782 = vmatmul.mubr.bf16.gmra.mrb[0].mxu0 %v175
  %v783 = vpop.f32.mrb[0].mxu0
  %v784 = vadd.f32 %v146, %v783
  %v785 = vpop.f32.mrb[0].mxu0
  %v786 = vadd.f32 %v150, %v785
  %v787 = vpop.f32.mrb[0].mxu0
  %v788 = vadd.f32 %v146, %v787
  %v789 = vpop.f32.mrb[0].mxu0
  %v790 = vadd.f32 %v150, %v789
  %791 = vdwg.mxu0
  %792 = vmatprep.subr.bf16.mxu0 %v558
  %793 = vmatpush1.bf16.msra.mxu0 %v557
  %794 = vmatprep.subr.bf16.mxu0 %v560
  %795 = vmatpush1.bf16.msra.mxu0 %v559
  %796 = vmatprep.subr.bf16.mxu0 %v562
  %797 = vmatpush1.bf16.msra.mxu0 %v561
  %798 = vmatprep.subr.bf16.mxu0 %v564
  %799 = vmatpush1.bf16.msra.mxu0 %v563
  %800 = vmatprep.subr.bf16.mxu0 %v566
  %801 = vmatpush1.bf16.msra.mxu0 %v565
  %802 = vmatprep.subr.bf16.mxu0 %v568
  %803 = vmatpush1.bf16.msra.mxu0 %v567
  %804 = vmatprep.subr.bf16.mxu0 %v570
  %805 = vmatpush1.bf16.msra.mxu0 %v569
  %806 = vmatprep.subr.bf16.mxu0 %v572
  %807 = vmatpush1.bf16.msra.mxu0 %v571
  %808 = vmatprep.subr.bf16.mxu0 %v574
  %809 = vmatpush1.bf16.msra.mxu0 %v573
  %810 = vmatprep.subr.bf16.mxu0 %v576
  %811 = vmatpush1.bf16.msra.mxu0 %v575
  %812 = vmatprep.subr.bf16.mxu0 %v578
  %813 = vmatpush1.bf16.msra.mxu0 %v577
  %814 = vmatprep.subr.bf16.mxu0 %v580
  %815 = vmatpush1.bf16.msra.mxu0 %v579
  %816 = vmatprep.subr.bf16.mxu0 %v582
  %817 = vmatpush1.bf16.msra.mxu0 %v581
  %818 = vmatprep.subr.bf16.mxu0 %v584
  %819 = vmatpush1.bf16.msra.mxu0 %v583
  %820 = vmatprep.subr.bf16.mxu0 %v586
  %821 = vmatpush1.bf16.msra.mxu0 %v585
  %822 = vmatprep.subr.bf16.mxu0 %v588
  %823 = vmatpush1.bf16.msra.mxu0 %v587
  %824 = vmatprep.mubr.bf16.mxu0 %v178
  %825 = vmatmul.mubr.bf16.gmra.mrb[0].mxu0 %v177
  %v826 = vpop.f32.mrb[0].mxu0
  %v827 = vadd.f32 %v784, %v826
  %v828 = vpop.f32.mrb[0].mxu0
  %v829 = vadd.f32 %v786, %v828
  %v830 = vpop.f32.mrb[0].mxu0
  %v831 = vadd.f32 %v788, %v830
  %v832 = vpop.f32.mrb[0].mxu0
  %v833 = vadd.f32 %v790, %v832
  %834 = vdwg.mxu0
  %835 = vmatprep.subr.bf16.mxu0 %v590
  %836 = vmatpush1.bf16.msra.mxu0 %v589
  %837 = vmatprep.subr.bf16.mxu0 %v592
  %838 = vmatpush1.bf16.msra.mxu0 %v591
  %839 = vmatprep.subr.bf16.mxu0 %v594
  %840 = vmatpush1.bf16.msra.mxu0 %v593
  %841 = vmatprep.subr.bf16.mxu0 %v596
  %842 = vmatpush1.bf16.msra.mxu0 %v595
  %843 = vmatprep.subr.bf16.mxu0 %v598
  %844 = vmatpush1.bf16.msra.mxu0 %v597
  %845 = vmatprep.subr.bf16.mxu0 %v600
  %846 = vmatpush1.bf16.msra.mxu0 %v599
  %847 = vmatprep.subr.bf16.mxu0 %v602
  %848 = vmatpush1.bf16.msra.mxu0 %v601
  %849 = vmatprep.subr.bf16.mxu0 %v604
  %850 = vmatpush1.bf16.msra.mxu0 %v603
  %851 = vmatprep.subr.bf16.mxu0 %v606
  %852 = vmatpush1.bf16.msra.mxu0 %v605
  %853 = vmatprep.subr.bf16.mxu0 %v608
  %854 = vmatpush1.bf16.msra.mxu0 %v607
  %855 = vmatprep.subr.bf16.mxu0 %v610
  %856 = vmatpush1.bf16.msra.mxu0 %v609
  %857 = vmatprep.subr.bf16.mxu0 %v612
  %858 = vmatpush1.bf16.msra.mxu0 %v611
  %859 = vmatprep.subr.bf16.mxu0 %v614
  %860 = vmatpush1.bf16.msra.mxu0 %v613
  %861 = vmatprep.subr.bf16.mxu0 %v616
  %862 = vmatpush1.bf16.msra.mxu0 %v615
  %863 = vmatprep.subr.bf16.mxu0 %v618
  %864 = vmatpush1.bf16.msra.mxu0 %v617
  %865 = vmatprep.subr.bf16.mxu0 %v620
  %866 = vmatpush1.bf16.msra.mxu0 %v619
  %867 = vmatprep.mubr.bf16.mxu0 %v180
  %868 = vmatmul.mubr.bf16.gmra.mrb[0].mxu0 %v179
  %v869 = vpop.f32.mrb[0].mxu0
  %v870 = vadd.f32 %v827, %v869
  %v871 = vpop.f32.mrb[0].mxu0
  %v872 = vadd.f32 %v829, %v871
  %v873 = vpop.f32.mrb[0].mxu0
  %v874 = vadd.f32 %v831, %v873
  %v875 = vpop.f32.mrb[0].mxu0
  %v876 = vadd.f32 %v833, %v875
  %877 = vdwg.mxu0
  %878 = vmatprep.subr.bf16.mxu0 %v622
  %879 = vmatpush1.bf16.msra.mxu0 %v621
  %880 = vmatprep.subr.bf16.mxu0 %v624
  %881 = vmatpush1.bf16.msra.mxu0 %v623
  %882 = vmatprep.subr.bf16.mxu0 %v626
  %883 = vmatpush1.bf16.msra.mxu0 %v625
  %884 = vmatprep.subr.bf16.mxu0 %v628
  %885 = vmatpush1.bf16.msra.mxu0 %v627
  %886 = vmatprep.subr.bf16.mxu0 %v630
  %887 = vmatpush1.bf16.msra.mxu0 %v629
  %888 = vmatprep.subr.bf16.mxu0 %v632
  %889 = vmatpush1.bf16.msra.mxu0 %v631
  %890 = vmatprep.subr.bf16.mxu0 %v634
  %891 = vmatpush1.bf16.msra.mxu0 %v633
  %892 = vmatprep.subr.bf16.mxu0 %v636
  %893 = vmatpush1.bf16.msra.mxu0 %v635
  %894 = vmatprep.subr.bf16.mxu0 0
  %895 = vmatpush1.bf16.msra.mxu0 0
  %896 = vmatprep.subr.bf16.mxu0 0
  %897 = vmatpush1.bf16.msra.mxu0 0
  %898 = vmatprep.subr.bf16.mxu0 0
  %899 = vmatpush1.bf16.msra.mxu0 0
  %900 = vmatprep.subr.bf16.mxu0 0
  %901 = vmatpush1.bf16.msra.mxu0 0
  %902 = vmatprep.subr.bf16.mxu0 0
  %903 = vmatpush1.bf16.msra.mxu0 0
  %904 = vmatprep.subr.bf16.mxu0 0
  %905 = vmatpush1.bf16.msra.mxu0 0
  %906 = vmatprep.subr.bf16.mxu0 0
  %907 = vmatpush1.bf16.msra.mxu0 0
  %908 = vmatprep.subr.bf16.mxu0 0
  %909 = vmatpush1.bf16.msra.mxu0 0
  %910 = vmatprep.mubr.bf16.mxu0 0
  %911 = vmatmul.mubr.bf16.gmra.mrb[0].mxu0 %v181
  %v912 = vpop.f32.mrb[0].mxu0
  %v913 = vadd.f32 %v870, %v912
  %v914 = vpop.f32.mrb[0].mxu0
  %v915 = vadd.f32 %v872, %v914
  %v916 = vpop.f32.mrb[0].mxu0
  %v917 = vadd.f32 %v874, %v916
  %v918 = vpop.f32.mrb[0].mxu0
  %v919 = vadd.f32 %v876, %v918
  %920 = vdwg.mxu0
  %v921 = vmax.f32 %v913, 0.0
  %v922 = vmax.f32 %v915, 0.0
  %v923 = vmax.f32 %v917, 0.0
  %v924 = vmax.f32 %v919, 0.0
  %v925 = vpack.c.bf16 %v923, %v921
  %v926 = vpack.c.bf16 %v924, %v922
  %v927 = vld [vmem:[%s3] sm:$0xf]
  %v928 = vld [vmem:[%s3 + $0x4] sm:$0xf]
  %v929 = vld [vmem:[%s3 + $0x8] sm:$0xf]
  %v930 = vld [vmem:[%s3 + $0xc] sm:$0xf]
  %v931 = vld [vmem:[%s3 + $0x10] sm:$0xf]
  %v932 = vld [vmem:[%s3 + $0x14] sm:$0xf]
  %v933 = vld [vmem:[%s3 + $0x18] sm:$0xf]
  %v934 = vld [vmem:[%s3 + $0x1c] sm:$0xf]
  %v935 = vld [vmem:[%s3 + $0x20] sm:$0xf]
  %v936 = vld [vmem:[%s3 + $0x24] sm:$0xf]
  %v937 = vld [vmem:[%s3 + $0x28] sm:$0xf]
  %v938 = vld [vmem:[%s3 + $0x2c] sm:$0xf]
  %v939 = vld [vmem:[%s3 + $0x30] sm:$0xf]
  %v940 = vld [vmem:[%s3 + $0x34] sm:$0xf]
  %v941 = vld [vmem:[%s3 + $0x38] sm:$0xf]
  %v942 = vld [vmem:[%s3 + $0x3c] sm:$0xf]
  %v943 = vld [vmem:[%s3 + $0x40] sm:$0xf]
  %v944 = vld [vmem:[%s3 + $0x44] sm:$0xf]
  %v945 = vld [vmem:[%s3 + $0x48] sm:$0xf]
  %v946 = vld [vmem:[%s3 + $0x4c] sm:$0xf]
  %v947 = vld [vmem:[%s3 + $0x50] sm:$0xf]
  %v948 = vld [vmem:[%s3 + $0x54] sm:$0xf]
  %v949 = vld [vmem:[%s3 + $0x58] sm:$0xf]
  %v950 = vld [vmem:[%s3 + $0x5c] sm:$0xf]
  %v951 = vld [vmem:[%s3 + $0x60] sm:$0xf]
  %v952 = vld [vmem:[%s3 + $0x64] sm:$0xf]
  %v953 = vld [vmem:[%s3 + $0x68] sm:$0xf]
  %v954 = vld [vmem:[%s3 + $0x6c] sm:$0xf]
  %v955 = vld [vmem:[%s3 + $0x70] sm:$0xf]
  %v956 = vld [vmem:[%s3 + $0x74] sm:$0xf]
  %v957 = vld [vmem:[%s3 + $0x78] sm:$0xf]
  %v958 = vld [vmem:[%s3 + $0x7c] sm:$0xf]
  %v959 = vld [vmem:[%s4] sm:$0x1]
  %v961 = vlaneseq
  %v962 = vshrl.u32 %v961, 7
  %v963 = vsub.s32 0, %v962
  %v964 = vrot.slane %v959, %v963
  %v998 = vunpack.c.l.b16 %v927
  %v999 = vunpack.c.l.b16 %v928
  %v1000 = vunpack.c.l.b16 %v929
  %v1001 = vunpack.c.l.b16 %v930
  %v1002 = vunpack.c.l.b16 %v931
  %v1003 = vunpack.c.l.b16 %v932
  %v1004 = vunpack.c.l.b16 %v933
  %v1005 = vunpack.c.l.b16 %v934
  %v1006 = vunpack.c.l.b16 %v935
  %v1007 = vunpack.c.l.b16 %v936
  %v1008 = vunpack.c.l.b16 %v937
  %v1009 = vunpack.c.l.b16 %v938
  %v1010 = vunpack.c.l.b16 %v939
  %v1011 = vunpack.c.l.b16 %v940
  %v1012 = vunpack.c.l.b16 %v941
  %v1013 = vunpack.c.l.b16 %v942
  %v1014 = vunpack.c.l.b16 %v943
  %v1015 = vunpack.c.l.b16 %v944
  %v1016 = vunpack.c.l.b16 %v945
  %v1017 = vunpack.c.l.b16 %v946
  %v1018 = vunpack.c.l.b16 %v947
  %v1019 = vunpack.c.l.b16 %v948
  %v1020 = vunpack.c.l.b16 %v949
  %v1021 = vunpack.c.l.b16 %v950
  %v1022 = vunpack.c.l.b16 %v951
  %v1023 = vunpack.c.l.b16 %v952
  %v1024 = vunpack.c.l.b16 %v953
  %v1025 = vunpack.c.l.b16 %v954
  %v1026 = vunpack.c.l.b16 %v955
  %v1027 = vunpack.c.l.b16 %v956
  %v1028 = vunpack.c.l.b16 %v957
  %v1029 = vunpack.c.l.b16 %v958
  %v1030 = vpack.c.b16 %v999, %v998
  %v1031 = vpack.c.b16 %v1001, %v1000
  %v1032 = vpack.c.b16 %v1003, %v1002
  %v1033 = vpack.c.b16 %v1005, %v1004
  %v1034 = vpack.c.b16 %v1007, %v1006
  %v1035 = vpack.c.b16 %v1009, %v1008
  %v1036 = vpack.c.b16 %v1011, %v1010
  %v1037 = vpack.c.b16 %v1013, %v1012
  %v1038 = vpack.c.b16 %v1015, %v1014
  %v1039 = vpack.c.b16 %v1017, %v1016
  %v1040 = vpack.c.b16 %v1019, %v1018
  %v1041 = vpack.c.b16 %v1021, %v1020
  %v1042 = vpack.c.b16 %v1023, %v1022
  %v1043 = vpack.c.b16 %v1025, %v1024
  %v1044 = vpack.c.b16 %v1027, %v1026
  %v1045 = vpack.c.b16 %v1029, %v1028
  %1062 = vmatprep.subr.bf16.mxu0 0
  %1063 = vmatpush1.bf16.msra.mxu0 %v1030
  %1064 = vmatprep.subr.bf16.mxu0 0
  %1065 = vmatpush1.bf16.msra.mxu0 %v1031
  %1066 = vmatprep.subr.bf16.mxu0 0
  %1067 = vmatpush1.bf16.msra.mxu0 %v1032
  %1068 = vmatprep.subr.bf16.mxu0 0
  %1069 = vmatpush1.bf16.msra.mxu0 %v1033
  %1070 = vmatprep.subr.bf16.mxu0 0
  %1071 = vmatpush1.bf16.msra.mxu0 %v1034
  %1072 = vmatprep.subr.bf16.mxu0 0
  %1073 = vmatpush1.bf16.msra.mxu0 %v1035
  %1074 = vmatprep.subr.bf16.mxu0 0
  %1075 = vmatpush1.bf16.msra.mxu0 %v1036
  %1076 = vmatprep.subr.bf16.mxu0 0
  %1077 = vmatpush1.bf16.msra.mxu0 %v1037
  %1078 = vmatprep.subr.bf16.mxu0 0
  %1079 = vmatpush1.bf16.msra.mxu0 %v1038
  %1080 = vmatprep.subr.bf16.mxu0 0
  %1081 = vmatpush1.bf16.msra.mxu0 %v1039
  %1082 = vmatprep.subr.bf16.mxu0 0
  %1083 = vmatpush1.bf16.msra.mxu0 %v1040
  %1084 = vmatprep.subr.bf16.mxu0 0
  %1085 = vmatpush1.bf16.msra.mxu0 %v1041
  %1086 = vmatprep.subr.bf16.mxu0 0
  %1087 = vmatpush1.bf16.msra.mxu0 %v1042
  %1088 = vmatprep.subr.bf16.mxu0 0
  %1089 = vmatpush1.bf16.msra.mxu0 %v1043
  %1090 = vmatprep.subr.bf16.mxu0 0
  %1091 = vmatpush1.bf16.msra.mxu0 %v1044
  %1092 = vmatprep.subr.bf16.mxu0 0
  %1093 = vmatpush1.bf16.msra.mxu0 %v1045
  %1094 = vmatprep.mubr.bf16.mxu0 %v926
  %1095 = vmatmul.mubr.bf16.gmra.mrb[0].mxu0 %v925
  %v1096 = vpop.f32.mrb[0].mxu0
  %v1097 = vadd.f32 %v964, %v1096
  %v1098 = vpop.f32.mrb[0].mxu0
  %v1099 = vpop.f32.mrb[0].mxu0
  %v1100 = vadd.f32 %v964, %v1099
  %v1101 = vpop.f32.mrb[0].mxu0
  %1102 = vdwg.mxu0
  %1103 = vst [vmem:[%s5] sm:$0xff] %v1097
  %1104 = vst [vmem:[%s5 + $0x8] sm:$0xff] %v1100
  // Predicated region
  $region22: #{_forward_impl.1} parent=0 // pred_check
    _
  $region23: #{_forward_impl.1} parent=0 // pred_check_branch
    %1106 = sbr.rel (0) target = $region25
  $region24: #{_forward_impl.1} parent=0 // pred_region
    _
  $region25: #{_forward_impl.1} parent=0 // pred_fallthru
    _
  // Predicated region
  $region26: #{_forward_impl.1} parent=0 // pred_check
    _
  $region27: #{_forward_impl.1} parent=0 // pred_check_branch
    %1108 = sbr.rel (0) target = $region29
  $region28: #{_forward_impl.1} parent=0 // pred_region
    _
  $region29: #{_forward_impl.1} parent=0 // pred_fallthru
    _

</llo_original>
